<compile_context>
chip_gen: v7x
topology: tpu7x:2x2x1
jax: 0.10.0
libtpu: 0.0.40
codegen_flags: <defaults>
</compile_context>

<pallas_src>
import jax
import jax.numpy as jnp
from jax.experimental import pallas as pl
from jax.experimental.pallas import tpu as pltpu


# ------------------------------ VMEM budget ----------------------------------
def _vmem_budget_bytes():
    """Usable VMEM budget for a single pallas_call, with Mosaic headroom."""
    try:
        cap = pltpu.get_tpu_info().vmem_capacity_bytes
    except Exception:  # pragma: no cover - conservative fallback (v7x size)
        cap = 64 << 20
    # Leave ~16 MiB for Mosaic internals; don't grow past ~100 MiB even on
    # 128 MiB parts (v5e/v6e) -- diminishing returns vs. spill risk.
    return int(min(max(cap - (16 << 20), 16 << 20), 100 << 20))


# --------------------------- stage 1: hidden ---------------------------------
def _prefix_hidden_kernel(emb_ref, w1_ref, b1_ref, h_ref):
    # emb: (S, E) bf16   w1: (E, M) bf16   b1: (1, M) f32   h: (S, M) bf16
    acc = jnp.dot(emb_ref[...], w1_ref[...], preferred_element_type=jnp.float32)
    h = jnp.tanh(acc + b1_ref[...])
    h_ref[...] = h.astype(h_ref.dtype)


def _prefix_hidden(emb, w1, b1, *, compute_dtype=jnp.bfloat16):
    S, E = emb.shape
    M = w1.shape[1]
    itm = jnp.dtype(compute_dtype).itemsize
    # Everything double-buffered by the (single-step) pipeline + slack.
    est = 2 * (S * E * itm + E * M * itm + M * 4 + S * M * itm) + (1 << 20)
    cp_kwargs = {}
    if est > (12 << 20):  # beyond conservative scoped defaults (v5e: 16 MiB)
        cp_kwargs["vmem_limit_bytes"] = int(min(est + (4 << 20),
                                                _vmem_budget_bytes()))
    return pl.pallas_call(
        _prefix_hidden_kernel,
        out_shape=jax.ShapeDtypeStruct((S, M), compute_dtype),
        in_specs=[
            pl.BlockSpec((S, E), lambda: (0, 0)),
            pl.BlockSpec((E, M), lambda: (0, 0)),
            pl.BlockSpec((1, M), lambda: (0, 0)),
        ],
        out_specs=pl.BlockSpec((S, M), lambda: (0, 0)),
        compiler_params=pltpu.CompilerParams(**cp_kwargs),
    )(emb.astype(compute_dtype), w1.astype(compute_dtype),
      b1.reshape(1, M).astype(jnp.float32))


# ------------------- stage 2: per-layer output slabs --------------------------
def _prefix_out_kernel(h_ref, w2_ref, b2_ref, out_ref):
    # h:   (S, M)      bf16  resident
    # w2:  (Lt, M, E)  bf16  streamed per grid step (double-buffered DMA)
    # b2:  (2L, 1, E)  f32   resident (single up-front DMA)
    # out: (Lt, S, E)  bf16  lane-dense
    lt = out_ref.shape[0]
    l0 = pl.multiple_of(pl.program_id(0) * lt, lt)
    b2_blk = b2_ref[pl.ds(l0, lt)]            # (Lt, 1, E) f32
    h = h_ref[...]
    for t in range(lt):                       # static unroll over the layer block
        o = jnp.dot(h, w2_ref[t], preferred_element_type=jnp.float32)
        out_ref[t] = (o + b2_blk[t]).astype(out_ref.dtype)


def _pick_layer_block(L2, per_lt_bytes, fixed_bytes, budget):
    """Largest Lt dividing L2 with an even grid >= 2 that fits the VMEM budget."""
    best = 1
    for lt in range(1, L2 + 1):
        if L2 % lt:
            continue
        g = L2 // lt
        if g < 2 or g % 2:     # keep >=2 (and even) steps for v7x's 2 TCs
            continue
        if fixed_bytes + lt * per_lt_bytes <= budget:
            best = max(best, lt)
    return best


def _prefix_out(h, w2, b2, *, out_dtype=jnp.bfloat16):
    S, M = h.shape
    L2, M2, E = w2.shape
    assert M2 == M

    budget = _vmem_budget_bytes()
    w2_item = jnp.dtype(w2.dtype).itemsize
    h_item = jnp.dtype(h.dtype).itemsize
    out_item = jnp.dtype(out_dtype).itemsize
    # Per-layer cost inside a grid step (W2 + output, both double-buffered).
    per_lt = 2 * M * E * w2_item + 2 * S * E * out_item
    # Resident h (double-buffered) + resident b2 + slack.
    fixed = 2 * S * M * h_item + L2 * E * 4 + (1 << 20)
    lt = _pick_layer_block(L2, per_lt, fixed, budget)

    est = fixed + lt * per_lt
    cp_kwargs = dict(dimension_semantics=("parallel",))  # shard slabs over TCs
    if est > (12 << 20):  # beyond conservative scoped defaults
        cp_kwargs["vmem_limit_bytes"] = int(min(est + (4 << 20), budget))

    return pl.pallas_call(
        _prefix_out_kernel,
        out_shape=jax.ShapeDtypeStruct((L2, S, E), out_dtype),
        grid=(L2 // lt,),
        in_specs=[
            pl.BlockSpec((S, M), lambda l: (0, 0)),        # h: resident
            pl.BlockSpec((lt, M, E), lambda l: (l, 0, 0)),  # W2 slab stream
            pl.BlockSpec((L2, 1, E), lambda l: (0, 0, 0)),  # b2: fully resident
        ],
        out_specs=pl.BlockSpec((lt, S, E), lambda l: (l, 0, 0)),  # lane-dense
        compiler_params=pltpu.CompilerParams(**cp_kwargs),
    )(h, w2, b2.reshape(L2, 1, E).astype(jnp.float32))


def prefix_mlp(emb, w1, b1, w2, b2, *, compute_dtype=jnp.bfloat16):
    """Embedding-MLP of Prefix.

    emb: (S, E)   w1: (E, M)   b1: (M,)   w2: (2L, M, E)   b2: (2L, E)
    Returns (2L, S, E) bfloat16 where out[l] = tanh(emb@W1+b1) @ W2[l] + b2[l].
    """
    h = _prefix_hidden(emb, w1, b1, compute_dtype=compute_dtype)
    return _prefix_out(h, w2.astype(compute_dtype), b2)


# ----------------------------- Prefix module --------------------------------
class PrefixPallas:
    def __init__(self, *, num_hidden_layers, num_attention_heads, hidden_size,
                 mid_dim, attn_bn, prefix_dropout=0.0, key=None,
                 param_dtype=jnp.bfloat16):
        self.match_n_layer = num_hidden_layers
        self.match_n_head = num_attention_heads
        self.n_embd = hidden_size
        self.match_n_embd = self.n_embd // self.match_n_head
        self.mid_dim = mid_dim
        self.attn_bn = attn_bn
        self.prefix_dropout = prefix_dropout  # 0.0 / eval -> identity

        out2l = self.match_n_layer * 2
        if key is None:
            key = jax.random.PRNGKey(0)

        def _lin(k, fan_in, shape):
            bound = 1.0 / jnp.sqrt(fan_in)
            return jax.random.uniform(k, shape, jnp.float32, -bound, bound)

        def _branch(k0, k1, k2, k3, k4):
            # Matmul operands (wte / w1 / w2) stored bf16 (MXU-native, halves
            # the HBM-bound W2 stream); biases stay f32.
            return dict(
                wte=jax.random.normal(k0, (self.attn_bn, self.n_embd),
                                      jnp.float32).astype(param_dtype),
                w1=_lin(k1, self.n_embd,
                        (self.n_embd, self.mid_dim)).astype(param_dtype),
                b1=_lin(k2, self.n_embd, (self.mid_dim,)),
                # W2 stored directly in the per-layer (2L, M, E) layout the
                # kernel grids over (column grouping matches nn.Linear + .view:
                # output column j -> layer j//E, within-layer offset j%E).
                w2=_lin(k3, self.mid_dim,
                        (out2l, self.mid_dim, self.n_embd)).astype(param_dtype),
                b2=_lin(k4, self.mid_dim, (out2l, self.n_embd)),
            )

        kk = jax.random.split(key, 15)
        self.params = {
            "dec": _branch(*kk[0:5]),      # wte / control_trans
            "cross": _branch(*kk[5:10]),   # wte2 / control_trans2
            "enc": _branch(*kk[10:15]),    # wte_enc / control_trans_enc
        }

    def _branch_kv(self, p):
        """Batch-invariant (2L, H, S, Dh) bf16 key/value slabs for one branch."""
        flat = prefix_mlp(p["wte"], p["w1"], p["b1"], p["w2"], p["b2"])  # (2L,S,E)
        L2, S, _ = flat.shape
        kv = flat.reshape(L2, S, self.match_n_head, self.match_n_embd)
        # Small, batch-invariant transpose; kept outside the kernel so the
        # kernel output stays lane-dense (last dim E, not Dh).
        return jnp.transpose(kv, (0, 2, 1, 3))  # (2L, H, S, Dh)

    def __call__(self, bsz, nsamples=1):
        old_bsz = bsz
        bsz = bsz * nsamples
        seqlen = self.attn_bn
        H, Dh = self.match_n_head, self.match_n_embd

        kv_dec = self._branch_kv(self.params["dec"])
        kv_cross = self._branch_kv(self.params["cross"])
        kv_enc = self._branch_kv(self.params["enc"])

        def _expand(slab, b):
            # (H, S, Dh) -> (b*H, S, Dh); bf16 broadcast deferred to the last
            # step (half the HBM traffic of the previous f32 version).
            return jnp.broadcast_to(slab[None], (b, H, seqlen, Dh)).reshape(
                b * H, seqlen, Dh)

        result = []
        for i in range(self.match_n_layer):
            result.append({
                "self": {
                    "prev_key": _expand(kv_dec[2 * i], bsz),
                    "prev_value": _expand(kv_dec[2 * i + 1], bsz),
                    "prev_key_padding_mask": jnp.zeros((bsz, seqlen), jnp.float32),
                },
                "encoder_decoder": {
                    "prev_key": _expand(kv_cross[2 * i], bsz),
                    "prev_value": _expand(kv_cross[2 * i + 1], bsz),
                    "prev_key_padding_mask": jnp.zeros((bsz, seqlen), jnp.float32),
                },
                "encoder": {
                    "prev_key": _expand(kv_enc[2 * i], old_bsz),
                    "prev_value": _expand(kv_enc[2 * i + 1], old_bsz),
                    "prev_key_padding_mask": jnp.zeros((old_bsz, seqlen),
                                                       jnp.float32),
                },
            })
        return result


# ----------------------------- self-check ------------------------------------
if __name__ == "__main__":
    # Small consistent config: L=2, H=4 heads, hidden=32 (head_dim=8),
    # mid_dim=16, attn_bn (prefix length) = 8.
    mod = PrefixPallas(
        num_hidden_layers=2,
        num_attention_heads=4,
        hidden_size=32,
        mid_dim=16,
        attn_bn=8,
        prefix_dropout=0.0,
        key=jax.random.PRNGKey(0),
    )

    bsz, nsamples = 2, 1
    out = mod(bsz, nsamples=nsamples)
    jax.block_until_ready(out[0]["self"]["prev_key"])

    # Shape checks against the PyTorch semantics.
    H, S, Dh, L = mod.match_n_head, mod.attn_bn, mod.match_n_embd, mod.match_n_layer
    assert len(out) == L
    assert out[0]["self"]["prev_key"].shape == (bsz * nsamples * H, S, Dh)
    assert out[0]["encoder"]["prev_value"].shape == (bsz * H, S, Dh)
    assert out[0]["self"]["prev_key_padding_mask"].shape == (bsz * nsamples, S)

    # Numerical check of the Pallas MLP (kernel output is bf16).
    p = mod.params["dec"]
    got = prefix_mlp(p["wte"], p["w1"], p["b1"], p["w2"], p["b2"])  # (2L, S, E)
    got32 = got.astype(jnp.float32)

    # Reference 1: mirrors the kernel compute path (bf16 operands, f32 acc).
    emb16 = p["wte"].astype(jnp.bfloat16)
    w1_16 = p["w1"].astype(jnp.bfloat16)
    w2_16 = p["w2"].astype(jnp.bfloat16)
    h16 = jnp.tanh(jnp.dot(emb16, w1_16, preferred_element_type=jnp.float32)
                   + p["b1"][None, :]).astype(jnp.bfloat16)
    ref16 = jnp.einsum("sm,lme->lse", h16, w2_16,
                       preferred_element_type=jnp.float32) + p["b2"][:, None, :]
    assert jnp.allclose(got32, ref16, atol=1e-2, rtol=1e-2), \
        float(jnp.max(jnp.abs(got32 - ref16)))

    # Reference 2: full f32 math (bf16 operands/output should stay within ~5e-2).
    h32 = jnp.tanh(p["wte"].astype(jnp.float32) @ p["w1"].astype(jnp.float32)
                   + p["b1"][None, :])
    ref32 = jnp.einsum("sm,lme->lse", h32,
                       p["w2"].astype(jnp.float32)) + p["b2"][:, None, :]
    assert jnp.allclose(got32, ref32, atol=5e-2, rtol=5e-2)

    # Layout check: layer 0 "self" prev_key equals the broadcast of the
    # (S, E) -> (H, S, Dh) view of the MLP output for slab 0.
    key0 = ref16[0].reshape(S, H, Dh).transpose(1, 0, 2)  # (H, S, Dh)
    assert jnp.allclose(out[0]["self"]["prev_key"][:H].astype(jnp.float32),
                        key0, atol=1e-2, rtol=1e-2)

    print("KERNEL_OK")
</pallas_src>

<mosaic_0001>
module attributes {stable_mosaic.version = 11 : i64} {
  func.func @_prefix_hidden_kernel(%arg0: memref<8x32xbf16, #tpu.memory_space<vmem>>, %arg1: memref<32x16xbf16, #tpu.memory_space<vmem>>, %arg2: memref<1x16xf32, #tpu.memory_space<vmem>>, %arg3: memref<8x16xbf16, #tpu.memory_space<vmem>>) attributes {dimension_semantics = [], scalar_prefetch = 0 : i64, scratch_operands = 0 : i64, tpu.core_type = #tpu.core_type<tc>} {
    %c0 = arith.constant 0 : index
    %c0_0 = arith.constant 0 : index
    %0 = vector.load %arg0[%c0, %c0_0] : memref<8x32xbf16, #tpu.memory_space<vmem>>, vector<8x32xbf16>
    %c0_1 = arith.constant 0 : index
    %c0_2 = arith.constant 0 : index
    %1 = vector.load %arg1[%c0_1, %c0_2] : memref<32x16xbf16, #tpu.memory_space<vmem>>, vector<32x16xbf16>
    %cst = arith.constant dense<0.000000e+00> : vector<8x16xf32>
    %2 = tpu.matmul %0, %1, %cst {dimension_numbers = #tpu.dot_dimension_numbers<[1], [0], [0], [1], [0, 0, 1, 1], [], []>} : vector<8x32xbf16>, vector<32x16xbf16>, vector<8x16xf32> -> vector<8x16xf32>
    %c0_3 = arith.constant 0 : index
    %c0_4 = arith.constant 0 : index
    %3 = vector.load %arg2[%c0_3, %c0_4] : memref<1x16xf32, #tpu.memory_space<vmem>>, vector<1x16xf32>
    %4 = vector.broadcast %3 : vector<1x16xf32> to vector<8x16xf32>
    %5 = arith.addf %2, %4 : vector<8x16xf32>
    %6 = math.tanh %5 : vector<8x16xf32>
    %7 = arith.truncf %6 : vector<8x16xf32> to vector<8x16xbf16>
    %c0_5 = arith.constant 0 : index
    %c0_6 = arith.constant 0 : index
    %8 = vector.load %arg3[%c0_5, %c0_6] : memref<8x16xbf16, #tpu.memory_space<vmem>>, vector<8x16xbf16>
    tpu.vector_store %arg3[%c0_5, %c0_6], %7 {strides = array<i32>} : memref<8x16xbf16, #tpu.memory_space<vmem>>, vector<8x16xbf16>,
    return
  }
}

</mosaic_0001>

<llo_original>
// kernel: tpu_custom_call.1
$region0: #{tpu_custom_call.1}
  #allocation0 [shape = 'u32[]', space=smem, size = 0x4, offset = 0x4, fixed_abs, tag = 'smem constant byte address 0x4 - core index']
  #allocation1 [shape = 'u32[144,128]{1,0:T(1,128)}', space=vmem, size = 0x12000, scoped, tag = 'internal scratch']
  %s0 = inlined_call_operand.vmem [shape: bf16[8,32], index: 0, kind: input, shape index: {}]
  %s1 = inlined_call_operand.vmem [shape: bf16[32,16], index: 1, kind: input, shape index: {}]
  %s2 = inlined_call_operand.vmem [shape: f32[1,16], index: 2, kind: input, shape index: {}]
  %s3 = inlined_call_operand.hbm [shape: bf16[8,16], index: 3, kind: output, shape index: {}]
  %s4 = sld [smem:[#allocation0]]
  $region22: #{tpu_custom_call.1} parent=0
    _
  %s6 = ssub.s32 1, %s4
  %s7 = scalar_select 0, %s6, %s4
  $region1: #{tpu_custom_call.1} parent=0
    #allocation2 [shape = 'u8[2048]{0}', space=vmem, size = 0x800, scoped, tag = 'output window, operand 0, single buffered']
    #allocation3 [shape = 's32[1]{0}', space=sflag, size = 0x4, scoped, tag = 'scoped memory for tpu_custom_call.1']
    %8 = vsyncpa [#allocation3], 0
    // Predicated region
    $region2: #{tpu_custom_call.1} parent=1 // pred_check
      _
    $region3: #{tpu_custom_call.1} parent=1 // pred_check_branch
      %10 = sbr.rel (0) target = $region5
    $region4: #{tpu_custom_call.1} parent=1 // pred_region
      _
    $region5: #{tpu_custom_call.1} parent=1 // pred_fallthru
      _
    // Predicated region
    $region6: #{tpu_custom_call.1} parent=1 // pred_check
      _
    $region7: #{tpu_custom_call.1} parent=1 // pred_check_branch
      %12 = sbr.rel (0) target = $region9
    $region8: #{tpu_custom_call.1} parent=1 // pred_region
      _
    $region9: #{tpu_custom_call.1} parent=1 // pred_fallthru
      _
    // Predicated region
    $region10: #{tpu_custom_call.1} parent=1 // pred_check
      _
    $region11: #{tpu_custom_call.1} parent=1 // pred_check_branch
      %14 = sbr.rel (0) target = $region13
    $region12: #{tpu_custom_call.1} parent=1 // pred_region
      _
    $region13: #{tpu_custom_call.1} parent=1 // pred_fallthru
      _
    %v16 = vld [vmem:[%s0] sm:$0xf]
    %v17 = vld [vmem:[%s1] sm:$0xf]
    %v18 = vld [vmem:[%s1 + $0x4] sm:$0xf]
    %v19 = vld [vmem:[%s1 + $0x8] sm:$0xf]
    %v20 = vld [vmem:[%s1 + $0xc] sm:$0xf]
    %v21 = vld [vmem:[%s2] sm:$0x1]
    %v23 = vlaneseq
    %v24 = vshrl.u32 %v23, 7
    %v25 = vsub.s32 0, %v24
    %v26 = vrot.slane %v21, %v25
    %v32 = vunpack.c.l.b16 %v17
    %v33 = vunpack.c.l.b16 %v18
    %v34 = vunpack.c.l.b16 %v19
    %v35 = vunpack.c.l.b16 %v20
    %v36 = vpack.c.b16 %v33, %v32
    %v37 = vpack.c.b16 %v35, %v34
    %vm40 = vcmask 261120
    %v42 = vsel %vm40, %v16, 0
    %44 = vmatprep.subr.bf16.mxu0 0
    %45 = vmatpush1.bf16.msra.mxu0 %v36
    %46 = vmatprep.subr.bf16.mxu0 0
    %47 = vmatpush1.bf16.msra.mxu0 %v37
    %48 = vmatprep.subr.bf16.mxu0 0
    %49 = vmatpush1.bf16.msra.mxu0 0
    %50 = vmatprep.subr.bf16.mxu0 0
    %51 = vmatpush1.bf16.msra.mxu0 0
    %52 = vmatprep.subr.bf16.mxu0 0
    %53 = vmatpush1.bf16.msra.mxu0 0
    %54 = vmatprep.subr.bf16.mxu0 0
    %55 = vmatpush1.bf16.msra.mxu0 0
    %56 = vmatprep.subr.bf16.mxu0 0
    %57 = vmatpush1.bf16.msra.mxu0 0
    %58 = vmatprep.subr.bf16.mxu0 0
    %59 = vmatpush1.bf16.msra.mxu0 0
    %60 = vmatprep.subr.bf16.mxu0 0
    %61 = vmatpush1.bf16.msra.mxu0 0
    %62 = vmatprep.subr.bf16.mxu0 0
    %63 = vmatpush1.bf16.msra.mxu0 0
    %64 = vmatprep.subr.bf16.mxu0 0
    %65 = vmatpush1.bf16.msra.mxu0 0
    %66 = vmatprep.subr.bf16.mxu0 0
    %67 = vmatpush1.bf16.msra.mxu0 0
    %68 = vmatprep.subr.bf16.mxu0 0
    %69 = vmatpush1.bf16.msra.mxu0 0
    %70 = vmatprep.subr.bf16.mxu0 0
    %71 = vmatpush1.bf16.msra.mxu0 0
    %72 = vmatprep.subr.bf16.mxu0 0
    %73 = vmatpush1.bf16.msra.mxu0 0
    %74 = vmatprep.subr.bf16.mxu0 0
    %75 = vmatpush1.bf16.msra.mxu0 0
    %76 = vmatprep.mubr.bf16.mxu0 0
    %77 = vmatmul.mubr.bf16.gmra.mrb[0].mxu0 %v42
    %v78 = vpop.f32.mrb[0].mxu0
    %v79 = vadd.f32 %v26, %v78
    %v80 = vpop.f32.mrb[0].mxu0
    %v81 = vpop.f32.mrb[0].mxu0
    %v82 = vpop.f32.mrb[0].mxu0
    %83 = vdwg.mxu0
    %v84 = vtanh.pop %v79
    %v85 = vpack.c.bf16 %v84, %v84
    %vm86 = vcmask 125952
    %87 = vst.msk [vmem:[#allocation2] sm:$0xf] %vm86, %v85
    // Predicated region
    $region14: #{tpu_custom_call.1} parent=1 // pred_check
      _
    $region15: #{tpu_custom_call.1} parent=1 // pred_check_branch
      %89 = sbr.rel (0) target = $region17
    $region16: #{tpu_custom_call.1} parent=1 // pred_region
      %s91 = ssub.s32 64, 64
      %92 = vsyncadd [#allocation3], %s91
      %s94 = sshll.u32 [#allocation2], 4
      %s95 = int_to_ptr.vmem [resolvable:$true] %s94
      %97 = dma.vmem_to_hbm [thread:$0]  %s95, 64, %s3, [#allocation3]
    $region17: #{tpu_custom_call.1} parent=1 // pred_fallthru
      _
    // Predicated region
    $region18: #{tpu_custom_call.1} parent=1 // pred_check
      _
    $region19: #{tpu_custom_call.1} parent=1 // pred_check_branch
      %99 = sbr.rel (0) target = $region21
    $region20: #{tpu_custom_call.1} parent=1 // pred_region
      %100 = dma.done [#allocation3], 64
    $region21: #{tpu_custom_call.1} parent=1 // pred_fallthru
      _
    %101 = vsyncpa [#allocation3], 1

</llo_original>
